<compile_context>
chip_gen: v7x
topology: tpu7x:2x2x1
jax: 0.10.0
libtpu: 0.0.40
codegen_flags: <defaults>
</compile_context>

<pallas_src>
import jax
import jax.numpy as jnp
from jax import lax
from jax.experimental import pallas as pl
from jax.experimental.pallas import tpu as pltpu


def dan_kernel(ids_ref, m_ref, b1_ref, w2_ref, b2_ref, out_ref):
    ids = ids_ref[...]                                   # (TB, L) int32
    tb, seq_len = ids.shape
    vp = m_ref.shape[0]

    # ---- Fused embedding gather + mean pool, expressed as counts @ (table@W1) ----
    # counts[b, v] = #{l : ids[b, l] == v}.  Short static unroll over L feeding one
    # (TB, Vp) bf16 accumulator -- no (TB, L, Vp) one-hot is ever materialized.
    lane_iota = lax.broadcasted_iota(jnp.int32, (tb, vp), 1)        # (TB, Vp)
    counts = jnp.zeros((tb, vp), jnp.bfloat16)
    for l in range(seq_len):                                        # L is small & static
        counts = counts + (ids[:, l:l + 1] == lane_iota).astype(jnp.bfloat16)

    # h_pre = mean(emb) @ W1 + b1 == (counts @ M) / L + b1, with M = table @ W1.
    h = jnp.dot(counts, m_ref[...], preferred_element_type=jnp.float32)   # (TB, Hp)
    h = h * (1.0 / seq_len) + b1_ref[...]                                  # mean + bias (f32)
    h = jnp.maximum(h, 0.0)                     # ReLU (dropout = identity in eval mode)

    # ---- fc2 + log_softmax over the (padded) class dim ----
    logits = jnp.dot(h.astype(jnp.bfloat16), w2_ref[...],
                     preferred_element_type=jnp.float32) + b2_ref[...]     # (TB, CP)
    # Padded class columns carry a -1e30 bias -> exp(pad - m) == 0, LSE unaffected.
    m = jnp.max(logits, axis=1, keepdims=True)
    lse = m + jnp.log(jnp.sum(jnp.exp(logits - m), axis=1, keepdims=True))
    out_ref[...] = logits - lse                                            # log_softmax(dim=1)


def _resident_spec(block_shape):
    # Constant index_map -> operand stays VMEM-resident across the batch grid.
    # Single-buffer it (double-buffering data that never changes only wastes VMEM);
    # fall back if this Pallas build does not accept pipeline_mode on BlockSpec.
    try:
        return pl.BlockSpec(block_shape, lambda i: (0, 0),
                            pipeline_mode=pl.Buffered(1))
    except Exception:  # pragma: no cover - API compatibility fallback
        return pl.BlockSpec(block_shape, lambda i: (0, 0))


def danwg_forward(x_ids, emb_table, w1_t, b1, w2_t, b2, *, tb=None):
    """x_ids: (B, L) int32; emb_table: (V, E); w1_t: (E, H); w2_t: (H, C)."""
    B, L = x_ids.shape
    V, E = emb_table.shape
    H = w1_t.shape[1]
    C = w2_t.shape[1]

    # ---- batch tiling: fill the MXU (256 rows on v6e/v7x), but keep >= 2 grid
    # steps when the batch allows so the "parallel" axis uses both v7x TensorCores.
    b8 = 8 * pl.cdiv(B, 8)
    if tb is None:
        tb = min(256, b8)
        if b8 >= 16 and b8 // tb < 2:
            tb = 8 * pl.cdiv(pl.cdiv(b8, 2), 8)
    Bp = tb * pl.cdiv(B, tb)                     # batch padded to whole tiles
    Vp = 128 * pl.cdiv(V, 128)                   # lane-dense vocab
    Hp = 128 * pl.cdiv(H, 128)                   # lane-dense hidden
    CP = 128 * pl.cdiv(C, 128)                   # lane-dense classes

    ids = x_ids.astype(jnp.int32)
    if Bp != B:
        ids = jnp.pad(ids, ((0, Bp - B), (0, 0)))        # pad rows with a valid id (0)

    # Eval-mode linearity: pre-compose table @ W1 in f32, pad, cast to bf16.
    # Padded vocab rows / hidden columns are zero -> contribute nothing.
    m_f32 = emb_table.astype(jnp.float32) @ w1_t.astype(jnp.float32)        # (V, H)
    m_bf16 = jnp.pad(m_f32, ((0, Vp - V), (0, Hp - H))).astype(jnp.bfloat16)
    b1_f32 = jnp.pad(b1.reshape(1, H).astype(jnp.float32), ((0, 0), (0, Hp - H)))
    w2_bf16 = jnp.pad(w2_t.astype(jnp.float32),
                      ((0, Hp - H), (0, CP - C))).astype(jnp.bfloat16)
    b2_f32 = jnp.pad(b2.reshape(1, C).astype(jnp.float32),
                     ((0, 0), (0, CP - C)), constant_values=-1e30)

    # VMEM budget: residents (single-buffered) + per-tile ids/out buffers + headroom.
    resident_bytes = m_bf16.size * 2 + w2_bf16.size * 2 + (b1_f32.size + b2_f32.size) * 4
    tile_bytes = tb * L * 4 + tb * CP * 4
    vmem_limit = int(min(100 * 2**20,
                         max(32 * 2**20, 2 * resident_bytes + 4 * tile_bytes + (2 << 20))))

    flops = 2 * Bp * (Vp * Hp + Hp * CP)
    bytes_accessed = (ids.size * 4 + m_bf16.size * 2 + w2_bf16.size * 2
                      + (Hp + CP) * 4 + Bp * CP * 4)

    out = pl.pallas_call(
        dan_kernel,
        out_shape=jax.ShapeDtypeStruct((Bp, CP), jnp.float32),
        grid_spec=pl.GridSpec(
            grid=(Bp // tb,),
            in_specs=[
                pl.BlockSpec((tb, L), lambda i: (i, 0)),   # token ids: one batch tile/step
                _resident_spec((Vp, Hp)),                  # fused table@W1   (resident)
                _resident_spec((1, Hp)),                   # fc1 bias         (resident)
                _resident_spec((Hp, CP)),                  # fc2 weight       (resident)
                _resident_spec((1, CP)),                   # fc2 bias (-1e30 padded)
            ],
            out_specs=pl.BlockSpec((tb, CP), lambda i: (i, 0)),
        ),
        compiler_params=pltpu.CompilerParams(
            # Batch tiles are independent -> shard across TensorCores on v7x megacore.
            dimension_semantics=("parallel",),
            vmem_limit_bytes=vmem_limit),
        cost_estimate=pl.CostEstimate(
            flops=flops, transcendentals=Bp * (CP + 1), bytes_accessed=bytes_accessed),
    )(ids, m_bf16, b1_f32, w2_bf16, b2_f32)

    return out[:B, :C]


def reference_forward(x_ids, emb_table, w1_t, b1, w2_t, b2):
    # Pure-JAX, full-f32 reference with the module's exact semantics (eval mode).
    embedded = jnp.take(emb_table, x_ids, axis=0)
    sent = jnp.mean(embedded, axis=1)
    h = jnp.maximum(sent @ w1_t + b1, 0.0)
    logits = h @ w2_t + b2
    return jax.nn.log_softmax(logits, axis=1)


if __name__ == "__main__":
    # Small shapes consistent with the module's forward.
    vocab_size, embedding_dim, hidden_size, num_classes = 50, 32, 32, 4
    batch, seq_len = 16, 8

    key = jax.random.PRNGKey(0)
    k_emb, k_w1, k_b1, k_w2, k_b2, k_x = jax.random.split(key, 6)

    # Deterministic parameter init (shapes from __init__).
    emb_table = jax.random.normal(k_emb, (vocab_size, embedding_dim), jnp.float32) * 0.1
    w1 = jax.random.normal(k_w1, (hidden_size, embedding_dim), jnp.float32) * 0.1   # torch (out, in)
    b1 = jax.random.normal(k_b1, (hidden_size,), jnp.float32) * 0.1
    w2 = jax.random.normal(k_w2, (num_classes, hidden_size), jnp.float32) * 0.1     # torch (out, in)
    b2 = jax.random.normal(k_b2, (num_classes,), jnp.float32) * 0.1

    # Token id input (B, L).
    x_ids = jax.random.randint(k_x, (batch, seq_len), 0, vocab_size, jnp.int32)

    # Pass transposed weights so the kernel does x @ W + b.
    w1_t = w1.T  # (E, H)
    w2_t = w2.T  # (H, C)

    # Default tb selection -> tb=8, grid=(2,): exercises the pipelined batch grid.
    out = danwg_forward(x_ids, emb_table, w1_t, b1, w2_t, b2)
    out = jax.block_until_ready(out)

    ref = reference_forward(x_ids, emb_table, w1_t, b1, w2_t, b2)
    assert out.shape == (batch, num_classes)
    # bf16 MXU operands (incl. pre-composed table@W1) vs pure-f32 reference -> loose tolerance.
    assert jnp.allclose(out, ref, atol=2e-2, rtol=2e-2), "mismatch vs reference"
    # Each row of log_softmax must exp-sum to 1 (padded class columns excluded).
    assert jnp.allclose(jnp.sum(jnp.exp(out), axis=1), 1.0, atol=1e-3)

    print("KERNEL_OK")
</pallas_src>

<mosaic_0001>
module attributes {stable_mosaic.version = 11 : i64} {
  func.func @dan_kernel(%arg0: i32, %arg1: memref<8x8xi32, #tpu.memory_space<vmem>>, %arg2: memref<128x128xbf16, #tpu.memory_space<vmem>>, %arg3: memref<1x128xf32, #tpu.memory_space<vmem>>, %arg4: memref<128x128xbf16, #tpu.memory_space<vmem>>, %arg5: memref<1x128xf32, #tpu.memory_space<vmem>>, %arg6: memref<8x128xf32, #tpu.memory_space<vmem>>) attributes {dimension_semantics = [#tpu.dimension_semantics<parallel>], iteration_bounds = array<i64: 2>, scalar_prefetch = 0 : i64, scratch_operands = 0 : i64, tpu.core_type = #tpu.core_type<tc>, window_params = [{transform_indices = @transform_0, window_bounds = array<i64: 8, 8>}, {pipeline_mode = #tpu.pipeline_mode<synchronous>, transform_indices = @transform_1, window_bounds = array<i64: 128, 128>}, {pipeline_mode = #tpu.pipeline_mode<synchronous>, transform_indices = @transform_2, window_bounds = array<i64: 1, 128>}, {pipeline_mode = #tpu.pipeline_mode<synchronous>, transform_indices = @transform_3, window_bounds = array<i64: 128, 128>}, {pipeline_mode = #tpu.pipeline_mode<synchronous>, transform_indices = @transform_4, window_bounds = array<i64: 1, 128>}, {transform_indices = @transform_5, window_bounds = array<i64: 8, 128>}]} {
    %c0 = arith.constant 0 : index
    %c0_0 = arith.constant 0 : index
    %0 = vector.load %arg1[%c0, %c0_0] : memref<8x8xi32, #tpu.memory_space<vmem>>, vector<8x8xi32>
    %1 = tpu.iota {dimensions = array<i32: 1>} : vector<8x128xi32>
    %cst = arith.constant 0.000000e+00 : bf16
    %2 = vector.broadcast %cst : bf16 to vector<8x128xbf16>
    %3 = vector.extract_strided_slice %0 {offsets = [0, 0], sizes = [8, 1], strides = [1, 1]} : vector<8x8xi32> to vector<8x1xi32>
    %4 = vector.broadcast %3 : vector<8x1xi32> to vector<8x128xi32>
    %5 = arith.cmpi eq, %4, %1 : vector<8x128xi32>
    %6 = arith.extui %5 : vector<8x128xi1> to vector<8x128xi32>
    %7 = arith.sitofp %6 : vector<8x128xi32> to vector<8x128xf32>
    %8 = arith.truncf %7 : vector<8x128xf32> to vector<8x128xbf16>
    %9 = arith.addf %2, %8 : vector<8x128xbf16>
    %10 = vector.extract_strided_slice %0 {offsets = [0, 1], sizes = [8, 1], strides = [1, 1]} : vector<8x8xi32> to vector<8x1xi32>
    %11 = vector.broadcast %10 : vector<8x1xi32> to vector<8x128xi32>
    %12 = arith.cmpi eq, %11, %1 : vector<8x128xi32>
    %13 = arith.extui %12 : vector<8x128xi1> to vector<8x128xi32>
    %14 = arith.sitofp %13 : vector<8x128xi32> to vector<8x128xf32>
    %15 = arith.truncf %14 : vector<8x128xf32> to vector<8x128xbf16>
    %16 = arith.addf %9, %15 : vector<8x128xbf16>
    %17 = vector.extract_strided_slice %0 {offsets = [0, 2], sizes = [8, 1], strides = [1, 1]} : vector<8x8xi32> to vector<8x1xi32>
    %18 = vector.broadcast %17 : vector<8x1xi32> to vector<8x128xi32>
    %19 = arith.cmpi eq, %18, %1 : vector<8x128xi32>
    %20 = arith.extui %19 : vector<8x128xi1> to vector<8x128xi32>
    %21 = arith.sitofp %20 : vector<8x128xi32> to vector<8x128xf32>
    %22 = arith.truncf %21 : vector<8x128xf32> to vector<8x128xbf16>
    %23 = arith.addf %16, %22 : vector<8x128xbf16>
    %24 = vector.extract_strided_slice %0 {offsets = [0, 3], sizes = [8, 1], strides = [1, 1]} : vector<8x8xi32> to vector<8x1xi32>
    %25 = vector.broadcast %24 : vector<8x1xi32> to vector<8x128xi32>
    %26 = arith.cmpi eq, %25, %1 : vector<8x128xi32>
    %27 = arith.extui %26 : vector<8x128xi1> to vector<8x128xi32>
    %28 = arith.sitofp %27 : vector<8x128xi32> to vector<8x128xf32>
    %29 = arith.truncf %28 : vector<8x128xf32> to vector<8x128xbf16>
    %30 = arith.addf %23, %29 : vector<8x128xbf16>
    %31 = vector.extract_strided_slice %0 {offsets = [0, 4], sizes = [8, 1], strides = [1, 1]} : vector<8x8xi32> to vector<8x1xi32>
    %32 = vector.broadcast %31 : vector<8x1xi32> to vector<8x128xi32>
    %33 = arith.cmpi eq, %32, %1 : vector<8x128xi32>
    %34 = arith.extui %33 : vector<8x128xi1> to vector<8x128xi32>
    %35 = arith.sitofp %34 : vector<8x128xi32> to vector<8x128xf32>
    %36 = arith.truncf %35 : vector<8x128xf32> to vector<8x128xbf16>
    %37 = arith.addf %30, %36 : vector<8x128xbf16>
    %38 = vector.extract_strided_slice %0 {offsets = [0, 5], sizes = [8, 1], strides = [1, 1]} : vector<8x8xi32> to vector<8x1xi32>
    %39 = vector.broadcast %38 : vector<8x1xi32> to vector<8x128xi32>
    %40 = arith.cmpi eq, %39, %1 : vector<8x128xi32>
    %41 = arith.extui %40 : vector<8x128xi1> to vector<8x128xi32>
    %42 = arith.sitofp %41 : vector<8x128xi32> to vector<8x128xf32>
    %43 = arith.truncf %42 : vector<8x128xf32> to vector<8x128xbf16>
    %44 = arith.addf %37, %43 : vector<8x128xbf16>
    %45 = vector.extract_strided_slice %0 {offsets = [0, 6], sizes = [8, 1], strides = [1, 1]} : vector<8x8xi32> to vector<8x1xi32>
    %46 = vector.broadcast %45 : vector<8x1xi32> to vector<8x128xi32>
    %47 = arith.cmpi eq, %46, %1 : vector<8x128xi32>
    %48 = arith.extui %47 : vector<8x128xi1> to vector<8x128xi32>
    %49 = arith.sitofp %48 : vector<8x128xi32> to vector<8x128xf32>
    %50 = arith.truncf %49 : vector<8x128xf32> to vector<8x128xbf16>
    %51 = arith.addf %44, %50 : vector<8x128xbf16>
    %52 = vector.extract_strided_slice %0 {offsets = [0, 7], sizes = [8, 1], strides = [1, 1]} : vector<8x8xi32> to vector<8x1xi32>
    %53 = vector.broadcast %52 : vector<8x1xi32> to vector<8x128xi32>
    %54 = arith.cmpi eq, %53, %1 : vector<8x128xi32>
    %55 = arith.extui %54 : vector<8x128xi1> to vector<8x128xi32>
    %56 = arith.sitofp %55 : vector<8x128xi32> to vector<8x128xf32>
    %57 = arith.truncf %56 : vector<8x128xf32> to vector<8x128xbf16>
    %58 = arith.addf %51, %57 : vector<8x128xbf16>
    %c0_1 = arith.constant 0 : index
    %c0_2 = arith.constant 0 : index
    %59 = vector.load %arg2[%c0_1, %c0_2] : memref<128x128xbf16, #tpu.memory_space<vmem>>, vector<128x128xbf16>
    %cst_3 = arith.constant dense<0.000000e+00> : vector<8x128xf32>
    %60 = tpu.matmul %58, %59, %cst_3 {dimension_numbers = #tpu.dot_dimension_numbers<[1], [0], [0], [1], [0, 0, 1, 1], [], []>} : vector<8x128xbf16>, vector<128x128xbf16>, vector<8x128xf32> -> vector<8x128xf32>
    %cst_4 = arith.constant 1.250000e-01 : f32
    %61 = vector.broadcast %cst_4 : f32 to vector<8x128xf32>
    %62 = arith.mulf %60, %61 : vector<8x128xf32>
    %c0_5 = arith.constant 0 : index
    %c0_6 = arith.constant 0 : index
    %63 = vector.load %arg3[%c0_5, %c0_6] : memref<1x128xf32, #tpu.memory_space<vmem>>, vector<1x128xf32>
    %64 = vector.broadcast %63 : vector<1x128xf32> to vector<8x128xf32>
    %65 = arith.addf %62, %64 : vector<8x128xf32>
    %cst_7 = arith.constant 0.000000e+00 : f32
    %66 = vector.broadcast %cst_7 : f32 to vector<8x128xf32>
    %67 = arith.maximumf %65, %66 : vector<8x128xf32>
    %68 = arith.truncf %67 : vector<8x128xf32> to vector<8x128xbf16>
    %c0_8 = arith.constant 0 : index
    %c0_9 = arith.constant 0 : index
    %69 = vector.load %arg4[%c0_8, %c0_9] : memref<128x128xbf16, #tpu.memory_space<vmem>>, vector<128x128xbf16>
    %cst_10 = arith.constant dense<0.000000e+00> : vector<8x128xf32>
    %70 = tpu.matmul %68, %69, %cst_10 {dimension_numbers = #tpu.dot_dimension_numbers<[1], [0], [0], [1], [0, 0, 1, 1], [], []>} : vector<8x128xbf16>, vector<128x128xbf16>, vector<8x128xf32> -> vector<8x128xf32>
    %c0_11 = arith.constant 0 : index
    %c0_12 = arith.constant 0 : index
    %71 = vector.load %arg5[%c0_11, %c0_12] : memref<1x128xf32, #tpu.memory_space<vmem>>, vector<1x128xf32>
    %72 = vector.broadcast %71 : vector<1x128xf32> to vector<8x128xf32>
    %73 = arith.addf %70, %72 : vector<8x128xf32>
    %cst_13 = arith.constant dense<0xFF800000> : vector<8xf32>
    %74 = vector.multi_reduction <maximumf>, %73, %cst_13 [1] : vector<8x128xf32> to vector<8xf32>
    %75 = vector.shape_cast %74 : vector<8xf32> to vector<8x1xf32>
    %76 = vector.broadcast %75 : vector<8x1xf32> to vector<8x128xf32>
    %77 = arith.subf %73, %76 : vector<8x128xf32>
    %78 = math.exp %77 : vector<8x128xf32>
    %cst_14 = arith.constant dense<0.000000e+00> : vector<8xf32>
    %79 = vector.multi_reduction <add>, %78, %cst_14 [1] : vector<8x128xf32> to vector<8xf32>
    %80 = vector.shape_cast %79 : vector<8xf32> to vector<8x1xf32>
    %81 = math.log %80 : vector<8x1xf32>
    %82 = arith.addf %75, %81 : vector<8x1xf32>
    %83 = vector.broadcast %82 : vector<8x1xf32> to vector<8x128xf32>
    %84 = arith.subf %73, %83 : vector<8x128xf32>
    %c0_15 = arith.constant 0 : index
    %c0_16 = arith.constant 0 : index
    %85 = vector.load %arg6[%c0_15, %c0_16] : memref<8x128xf32, #tpu.memory_space<vmem>>, vector<8x128xf32>
    tpu.vector_store %arg6[%c0_15, %c0_16], %84 {strides = array<i32>} : memref<8x128xf32, #tpu.memory_space<vmem>>, vector<8x128xf32>,
    return
  }
  func.func @transform_0(%arg0: i32) -> (i32, i32) {
    %c0_i32 = arith.constant 0 : i32
    %c0_i32_0 = arith.constant 0 : i32
    return %arg0, %c0_i32 : i32, i32
  }
  func.func @transform_1(%arg0: i32) -> (i32, i32) {
    %c0_i32 = arith.constant 0 : i32
    %c0_i32_0 = arith.constant 0 : i32
    %c0_i32_1 = arith.constant 0 : i32
    return %c0_i32, %c0_i32_0 : i32, i32
  }
  func.func @transform_2(%arg0: i32) -> (i32, i32) {
    %c0_i32 = arith.constant 0 : i32
    %c0_i32_0 = arith.constant 0 : i32
    %c0_i32_1 = arith.constant 0 : i32
    return %c0_i32, %c0_i32_0 : i32, i32
  }
  func.func @transform_3(%arg0: i32) -> (i32, i32) {
    %c0_i32 = arith.constant 0 : i32
    %c0_i32_0 = arith.constant 0 : i32
    %c0_i32_1 = arith.constant 0 : i32
    return %c0_i32, %c0_i32_0 : i32, i32
  }
  func.func @transform_4(%arg0: i32) -> (i32, i32) {
    %c0_i32 = arith.constant 0 : i32
    %c0_i32_0 = arith.constant 0 : i32
    %c0_i32_1 = arith.constant 0 : i32
    return %c0_i32, %c0_i32_0 : i32, i32
  }
  func.func @transform_5(%arg0: i32) -> (i32, i32) {
    %c0_i32 = arith.constant 0 : i32
    %c0_i32_0 = arith.constant 0 : i32
    return %arg0, %c0_i32 : i32, i32
  }
}

</mosaic_0001>

<llo_original>
// kernel: tpu_custom_call.1
$region0: #{tpu_custom_call.1}
  #allocation0 [shape = 'u32[]', space=smem, size = 0x4, offset = 0x4, fixed_abs, tag = 'smem constant byte address 0x4 - core index']
  #allocation1 [shape = 'u32[144,128]{1,0:T(1,128)}', space=vmem, size = 0x12000, scoped, tag = 'internal scratch']
  %s0 = inlined_call_operand.vmem [shape: s32[16,8], index: 0, kind: input, shape index: {}]
  %s1 = inlined_call_operand.hbm [shape: bf16[128,128], index: 1, kind: input, shape index: {}]
  %s2 = inlined_call_operand.vmem [shape: f32[1,128], index: 2, kind: input, shape index: {}]
  %s3 = inlined_call_operand.hbm [shape: bf16[128,128], index: 3, kind: input, shape index: {}]
  %s4 = inlined_call_operand.vmem [shape: f32[1,128], index: 4, kind: input, shape index: {}]
  %s5 = inlined_call_operand.hbm [shape: f32[16,128], index: 5, kind: output, shape index: {}]
  %s6 = sld [smem:[#allocation0]]
  $region61: #{tpu_custom_call.1} parent=0
    _
  %s8 = ssub.s32 1, %s6
  %s9 = scalar_select 0, %s8, %s6
  $region1: #{tpu_custom_call.1} parent=0
    #allocation2 [shape = 'u8[32768]{0}', space=vmem, size = 0x8000, scoped, tag = 'input window, operand 1, single buffered']
    #allocation3 [shape = 's32[2]{0}', space=sflag, size = 0x8, scoped, tag = 'scoped memory for tpu_custom_call.1']
    #allocation4 [shape = 's32[2]{0}', space=sflag, size = 0x8, scoped, tag = 'scoped memory for tpu_custom_call.1']
    #allocation5 [shape = 'u8[32768]{0}', space=vmem, size = 0x8000, scoped, tag = 'input window, operand 3, single buffered']
    #allocation6 [shape = 's32[1]{0}', space=sflag, size = 0x4, scoped, tag = 'scoped memory for tpu_custom_call.1']
    #allocation7 [shape = 'u8[8192]{0}', space=vmem, size = 0x2000, scoped, tag = 'output window, operand 0']
    %10 = vsyncpa [#allocation3], 0
    %11 = vsyncpa [#allocation6], 0
    %12 = vsyncpa [#allocation4], 0
    %s13 = scalar_lea.sflag [#allocation4], 1
    %14 = vsyncpa %s13, 0
    loop: start=0, step=1, limit=4
    $region2: #{tpu_custom_call.1} parent=1 // loop_pre_header
      _
    $region3: #{tpu_custom_call.1} parent=1 // loop_header
      %s16 = sphi 0, %s20
      %p17 = scmp.ge.s32.totalorder %s16, 4
      %s26 = sphi 0, %s28
      %s29 = sphi 0, %s26
      %s30 = sphi 0, %s29
      %s46 = sphi 0, %s30
      %s50 = sphi 0, %s50
      %s52 = sphi 0, %s50
      %s53 = sphi 0, %s52
      %s67 = sphi 0, %s53
      %s71 = sphi 0, %s71
      %s73 = sphi 0, %s71
      %s74 = sphi 0, %s73
      %s88 = sphi 0, %s74
      %s92 = sphi 0, %s92
      %s94 = sphi 0, %s92
      %s95 = sphi 0, %s94
      %s109 = sphi 0, %s95
      %s113 = sphi 0, %s113
      %s115 = sphi 0, %s113
      %s116 = sphi 0, %s115
      %s130 = sphi 0, %s116
      %s136 = sphi 0, %s138
      %s139 = sphi 0, %s136
      %s140 = sphi 0, %s139
      %s156 = sphi 0, %s140
    $region4: #{tpu_custom_call.1} parent=1 // loop_header_branch
      %19 = sbr.rel (%p17) target = $region8
    $region5: #{tpu_custom_call.1} parent=1 // loop_body
      %s21 = ssub.s32 %s16, 1
      %s22 = ssub.s32 %s16, 2
      %s23 = sadd.s32 %s16, 1
      %s24 = ssub.s32 %s16, %s23
      %p25 = scmp.eq.s32.totalorder %s24, 0
      %s27 = sadd.s32 %s26, 1
      %s28 = scalar_select %p25, %s26, %s27
      %p31 = pneg %p25
      %p32 = scmp.eq.s32.totalorder %s16, 1
      %p33 = por %p31, %p32
      %p34 = scmp.ne.s32.totalorder %s26, %s29
      %p35 = scmp.eq.s32.totalorder %s16, 0
      %p36 = por %p34, %p35
      %p37 = scmp.ne.s32.totalorder %s26, %s29
      %p38 = scmp.eq.s32.totalorder %s21, 1
      %p39 = por %p37, %p38
      %p40 = scmp.ne.s32.totalorder %s29, %s30
      %p41 = scmp.eq.s32.totalorder %s21, 0
      %p42 = por %p40, %p41
      %p43 = scmp.ne.s32.totalorder %s29, %s30
      %p44 = scmp.eq.s32.totalorder %s22, 1
      %p45 = por %p43, %p44
      %p47 = scmp.ne.s32.totalorder %s30, %s46
      %p48 = scmp.eq.s32.totalorder %s22, 0
      %p49 = por %p47, %p48
      %s51 = sadd.s32 %s50, 1
      %p54 = scmp.eq.s32.totalorder %s16, 1
      %p55 = scmp.ne.s32.totalorder %s50, %s52
      %p56 = scmp.eq.s32.totalorder %s16, 0
      %p57 = por %p55, %p56
      %p58 = scmp.ne.s32.totalorder %s50, %s52
      %p59 = scmp.eq.s32.totalorder %s21, 1
      %p60 = por %p58, %p59
      %p61 = scmp.ne.s32.totalorder %s52, %s53
      %p62 = scmp.eq.s32.totalorder %s21, 0
      %p63 = por %p61, %p62
      %p64 = scmp.ne.s32.totalorder %s52, %s53
      %p65 = scmp.eq.s32.totalorder %s22, 1
      %p66 = por %p64, %p65
      %p68 = scmp.ne.s32.totalorder %s53, %s67
      %p69 = scmp.eq.s32.totalorder %s22, 0
      %p70 = por %p68, %p69
      %s72 = sadd.s32 %s71, 1
      %p75 = scmp.eq.s32.totalorder %s16, 1
      %p76 = scmp.ne.s32.totalorder %s71, %s73
      %p77 = scmp.eq.s32.totalorder %s16, 0
      %p78 = por %p76, %p77
      %p79 = scmp.ne.s32.totalorder %s71, %s73
      %p80 = scmp.eq.s32.totalorder %s21, 1
      %p81 = por %p79, %p80
      %p82 = scmp.ne.s32.totalorder %s73, %s74
      %p83 = scmp.eq.s32.totalorder %s21, 0
      %p84 = por %p82, %p83
      %p85 = scmp.ne.s32.totalorder %s73, %s74
      %p86 = scmp.eq.s32.totalorder %s22, 1
      %p87 = por %p85, %p86
      %p89 = scmp.ne.s32.totalorder %s74, %s88
      %p90 = scmp.eq.s32.totalorder %s22, 0
      %p91 = por %p89, %p90
      %s93 = sadd.s32 %s92, 1
      %p96 = scmp.eq.s32.totalorder %s16, 1
      %p97 = scmp.ne.s32.totalorder %s92, %s94
      %p98 = scmp.eq.s32.totalorder %s16, 0
      %p99 = por %p97, %p98
      %p100 = scmp.ne.s32.totalorder %s92, %s94
      %p101 = scmp.eq.s32.totalorder %s21, 1
      %p102 = por %p100, %p101
      %p103 = scmp.ne.s32.totalorder %s94, %s95
      %p104 = scmp.eq.s32.totalorder %s21, 0
      %p105 = por %p103, %p104
      %p106 = scmp.ne.s32.totalorder %s94, %s95
      %p107 = scmp.eq.s32.totalorder %s22, 1
      %p108 = por %p106, %p107
      %p110 = scmp.ne.s32.totalorder %s95, %s109
      %p111 = scmp.eq.s32.totalorder %s22, 0
      %p112 = por %p110, %p111
      %s114 = sadd.s32 %s113, 1
      %p117 = scmp.eq.s32.totalorder %s16, 1
      %p118 = scmp.ne.s32.totalorder %s113, %s115
      %p119 = scmp.eq.s32.totalorder %s16, 0
      %p120 = por %p118, %p119
      %p121 = scmp.ne.s32.totalorder %s113, %s115
      %p122 = scmp.eq.s32.totalorder %s21, 1
      %p123 = por %p121, %p122
      %p124 = scmp.ne.s32.totalorder %s115, %s116
      %p125 = scmp.eq.s32.totalorder %s21, 0
      %p126 = por %p124, %p125
      %p127 = scmp.ne.s32.totalorder %s115, %s116
      %p128 = scmp.eq.s32.totalorder %s22, 1
      %p129 = por %p127, %p128
      %p131 = scmp.ne.s32.totalorder %s116, %s130
      %p132 = scmp.eq.s32.totalorder %s22, 0
      %p133 = por %p131, %p132
      %s134 = ssub.s32 %s16, %s23
      %p135 = scmp.eq.s32.totalorder %s134, 0
      %s137 = sadd.s32 %s136, 1
      %s138 = scalar_select %p135, %s136, %s137
      %p141 = pneg %p135
      %p142 = scmp.eq.s32.totalorder %s16, 1
      %p143 = por %p141, %p142
      %p144 = scmp.ne.s32.totalorder %s136, %s139
      %p145 = scmp.eq.s32.totalorder %s16, 0
      %p146 = por %p144, %p145
      %p147 = scmp.ne.s32.totalorder %s136, %s139
      %p148 = scmp.eq.s32.totalorder %s21, 1
      %p149 = por %p147, %p148
      %p150 = scmp.ne.s32.totalorder %s139, %s140
      %p151 = scmp.eq.s32.totalorder %s21, 0
      %p152 = por %p150, %p151
      %p153 = scmp.ne.s32.totalorder %s139, %s140
      %p154 = scmp.eq.s32.totalorder %s22, 1
      %p155 = por %p153, %p154
      %p157 = scmp.ne.s32.totalorder %s140, %s156
      %p158 = scmp.eq.s32.totalorder %s22, 0
      %p159 = por %p157, %p158
      %p160 = scmp.le.s32.totalorder 1, %s16
      %p161 = scmp.lt.s32.totalorder %s16, 3
      %p162 = pnand %p160, %p161
      %p163 = pneg %p162
      // Predicated region
      $region9: #{tpu_custom_call.1} parent=5 // pred_check
        _
      $region10: #{tpu_custom_call.1} parent=5 // pred_check_branch
        %165 = sbr.rel (%p162) target = $region12
      $region11: #{tpu_custom_call.1} parent=5 // pred_region
        %s166 = ssub.s32 %s16, 1
        // Predicated region
        $region13: #{tpu_custom_call.1} parent=11 // pred_check
          %p167 = pneg %p63
        $region14: #{tpu_custom_call.1} parent=11 // pred_check_branch
          %169 = sbr.rel (%p167) target = $region16
        $region15: #{tpu_custom_call.1} parent=11 // pred_region
          %s171 = ssub.s32 1024, 1024
          %172 = vsyncadd [#allocation3], %s171
          %s173 = sshll.u32 [#allocation2], 4
          %s174 = int_to_ptr.vmem [resolvable:$true] %s173
          %179 = dma.hbm_to_vmem [thread:$0]  %s1, 1024, %s174, [#allocation3], 64, 64, 4
        $region16: #{tpu_custom_call.1} parent=11 // pred_fallthru
          _
        // Predicated region
        $region17: #{tpu_custom_call.1} parent=11 // pred_check
          %p180 = pneg %p84
        $region18: #{tpu_custom_call.1} parent=11 // pred_check_branch
          %182 = sbr.rel (%p180) target = $region20
        $region19: #{tpu_custom_call.1} parent=11 // pred_region
          _
        $region20: #{tpu_custom_call.1} parent=11 // pred_fallthru
          _
        // Predicated region
        $region21: #{tpu_custom_call.1} parent=11 // pred_check
          %p183 = pneg %p105
        $region22: #{tpu_custom_call.1} parent=11 // pred_check_branch
          %185 = sbr.rel (%p183) target = $region24
        $region23: #{tpu_custom_call.1} parent=11 // pred_region
          %s187 = ssub.s32 1024, 1024
          %188 = vsyncadd [#allocation6], %s187
          %s189 = sshll.u32 [#allocation5], 4
          %s190 = int_to_ptr.vmem [resolvable:$true] %s189
          %195 = dma.hbm_to_vmem [thread:$0]  %s3, 1024, %s190, [#allocation6], 64, 64, 4
        $region24: #{tpu_custom_call.1} parent=11 // pred_fallthru
          _
        // Predicated region
        $region25: #{tpu_custom_call.1} parent=11 // pred_check
          %p196 = pneg %p126
        $region26: #{tpu_custom_call.1} parent=11 // pred_check_branch
          %198 = sbr.rel (%p196) target = $region28
        $region27: #{tpu_custom_call.1} parent=11 // pred_region
          _
        $region28: #{tpu_custom_call.1} parent=11 // pred_fallthru
          _
      $region12: #{tpu_custom_call.1} parent=5 // pred_fallthru
        _
      %p199 = scmp.lt.s32.totalorder %s16, 2
      // Predicated region
      $region29: #{tpu_custom_call.1} parent=5 // pred_check
        %p200 = pneg %p199
      $region30: #{tpu_custom_call.1} parent=5 // pred_check_branch
        %202 = sbr.rel (%p200) target = $region32
      $region31: #{tpu_custom_call.1} parent=5 // pred_region
        // Predicated region
        $region33: #{tpu_custom_call.1} parent=31 // pred_check
          %p203 = pneg %p36
        $region34: #{tpu_custom_call.1} parent=31 // pred_check_branch
          %205 = sbr.rel (%p203) target = $region36
        $region35: #{tpu_custom_call.1} parent=31 // pred_region
          %p206 = scmp.lt.s32.totalorder %s16, 1
          %s207 = scalar_select %p206, %s16, 1
          %s208 = smul.addr %s207, 8
          %s209 = scalar_lea.vmem %s0, %s208
        $region36: #{tpu_custom_call.1} parent=31 // pred_fallthru
          _
      $region32: #{tpu_custom_call.1} parent=5 // pred_fallthru
        _
      %p210 = scmp.le.s32.totalorder 1, %s16
      %p211 = scmp.lt.s32.totalorder %s16, 3
      %p212 = pnand %p210, %p211
      %p213 = pneg %p212
      // Predicated region
      $region37: #{tpu_custom_call.1} parent=5 // pred_check
        _
      $region38: #{tpu_custom_call.1} parent=5 // pred_check_branch
        %215 = sbr.rel (%p212) target = $region40
      $region39: #{tpu_custom_call.1} parent=5 // pred_region
        %s216 = ssub.s32 %s16, 1
        // Predicated region
        $region41: #{tpu_custom_call.1} parent=39 // pred_check
          %p217 = pneg %p63
        $region42: #{tpu_custom_call.1} parent=39 // pred_check_branch
          %219 = sbr.rel (%p217) target = $region44
        $region43: #{tpu_custom_call.1} parent=39 // pred_region
          %220 = dma.done [#allocation3], 1024
        $region44: #{tpu_custom_call.1} parent=39 // pred_fallthru
          _
        // Predicated region
        $region45: #{tpu_custom_call.1} parent=39 // pred_check
          %p221 = pneg %p105
        $region46: #{tpu_custom_call.1} parent=39 // pred_check_branch
          %223 = sbr.rel (%p221) target = $region48
        $region47: #{tpu_custom_call.1} parent=39 // pred_region
          %224 = dma.done [#allocation6], 1024
        $region48: #{tpu_custom_call.1} parent=39 // pred_fallthru
          _
        %p225 = scmp.lt.s32.totalorder %s21, 1
        %s226 = scalar_select %p225, %s21, 1
        %s227 = smul.addr %s226, 8
        %s228 = scalar_lea.vmem %s0, %s227
        %p229 = pneg %p42
        %p230 = pneg %p39
        %p231 = pneg %p63
        %p232 = pneg %p60
        %p233 = pneg %p84
        %p234 = pneg %p81
        %p235 = pneg %p105
        %p236 = pneg %p102
        %p237 = pneg %p126
        %p238 = pneg %p123
        %p239 = pneg %p152
        %p240 = pneg %p149
        %s241 = sand.u32 %s139, 1
        %s242 = scalar_lea.sflag [#allocation4], %s241
        %s243 = sand.u32 %s139, 1
        %s244 = smul.addr %s243, 8
        %s245 = scalar_lea.vmem [#allocation7], %s244
        %p246 = scmp.lt.s32.totalorder %s21, 1
        %s247 = scalar_select %p246, %s21, 1
        %s248 = smul.addr %s247, 8
        %s249 = scalar_lea.vmem %s0, %s248
        %v251 = vld [vmem:[%s249] sm:$0xff]
        %v252 = vlaneseq
        %v253 = vand.u32 %v252, 127
        %254 = vset.pattern.permute.xlu0 0
        %255 = vperm.xlu0 %254, %v251
        %v256 = vpop.permute.xlu0 %255
        %vm257 = vcmp.eq.s32.totalorder %v256, %v253
        %v258 = vsel %vm257, 1, 0
        %v259 = vcvt.s32.f32 %v258
        %v260 = vpack.c.bf16 %v259, %v259
        %v261 = vadd.bf16 %v260, 0
        %262 = vset.pattern.permute.xlu0 1
        %263 = vperm.xlu0 %262, %v251
        %v264 = vpop.permute.xlu0 %263
        %vm265 = vcmp.eq.s32.totalorder %v264, %v253
        %v266 = vsel %vm265, 1, 0
        %v267 = vcvt.s32.f32 %v266
        %v268 = vpack.c.bf16 %v267, %v267
        %v269 = vadd.bf16 %v261, %v268
        %270 = vset.pattern.permute.xlu0 2
        %271 = vperm.xlu0 %270, %v251
        %v272 = vpop.permute.xlu0 %271
        %vm273 = vcmp.eq.s32.totalorder %v272, %v253
        %v274 = vsel %vm273, 1, 0
        %v275 = vcvt.s32.f32 %v274
        %v276 = vpack.c.bf16 %v275, %v275
        %v277 = vadd.bf16 %v269, %v276
        %278 = vset.pattern.permute.xlu0 3
        %279 = vperm.xlu0 %278, %v251
        %v280 = vpop.permute.xlu0 %279
        %vm281 = vcmp.eq.s32.totalorder %v280, %v253
        %v282 = vsel %vm281, 1, 0
        %v283 = vcvt.s32.f32 %v282
        %v284 = vpack.c.bf16 %v283, %v283
        %v285 = vadd.bf16 %v277, %v284
        %286 = vset.pattern.permute.xlu0 4
        %287 = vperm.xlu0 %286, %v251
        %v288 = vpop.permute.xlu0 %287
        %vm289 = vcmp.eq.s32.totalorder %v288, %v253
        %v290 = vsel %vm289, 1, 0
        %v291 = vcvt.s32.f32 %v290
        %v292 = vpack.c.bf16 %v291, %v291
        %v293 = vadd.bf16 %v285, %v292
        %294 = vset.pattern.permute.xlu0 5
        %295 = vperm.xlu0 %294, %v251
        %v296 = vpop.permute.xlu0 %295
        %vm297 = vcmp.eq.s32.totalorder %v296, %v253
        %v298 = vsel %vm297, 1, 0
        %v299 = vcvt.s32.f32 %v298
        %v300 = vpack.c.bf16 %v299, %v299
        %v301 = vadd.bf16 %v293, %v300
        %302 = vset.pattern.permute.xlu0 6
        %303 = vperm.xlu0 %302, %v251
        %v304 = vpop.permute.xlu0 %303
        %vm305 = vcmp.eq.s32.totalorder %v304, %v253
        %v306 = vsel %vm305, 1, 0
        %v307 = vcvt.s32.f32 %v306
        %v308 = vpack.c.bf16 %v307, %v307
        %v309 = vadd.bf16 %v301, %v308
        %310 = vset.pattern.permute.xlu0 7
        %311 = vperm.xlu0 %310, %v251
        %v312 = vpop.permute.xlu0 %311
        %vm313 = vcmp.eq.s32.totalorder %v312, %v253
        %v314 = vsel %vm313, 1, 0
        %v315 = vcvt.s32.f32 %v314
        %v316 = vpack.c.bf16 %v315, %v315
        %v317 = vadd.bf16 %v309, %v316
        %v318 = vld [vmem:[#allocation2] sm:$0xf]
        %v319 = vld [vmem:[#allocation2 + $0x4] sm:$0xf]
        %v320 = vld [vmem:[#allocation2 + $0x8] sm:$0xf]
        %v321 = vld [vmem:[#allocation2 + $0xc] sm:$0xf]
        %v322 = vld [vmem:[#allocation2 + $0x10] sm:$0xf]
        %v323 = vld [vmem:[#allocation2 + $0x14] sm:$0xf]
        %v324 = vld [vmem:[#allocation2 + $0x18] sm:$0xf]
        %v325 = vld [vmem:[#allocation2 + $0x1c] sm:$0xf]
        %v326 = vld [vmem:[#allocation2 + $0x20] sm:$0xf]
        %v327 = vld [vmem:[#allocation2 + $0x24] sm:$0xf]
        %v328 = vld [vmem:[#allocation2 + $0x28] sm:$0xf]
        %v329 = vld [vmem:[#allocation2 + $0x2c] sm:$0xf]
        %v330 = vld [vmem:[#allocation2 + $0x30] sm:$0xf]
        %v331 = vld [vmem:[#allocation2 + $0x34] sm:$0xf]
        %v332 = vld [vmem:[#allocation2 + $0x38] sm:$0xf]
        %v333 = vld [vmem:[#allocation2 + $0x3c] sm:$0xf]
        %v350 = vunpack.c.l.b16 %v318
        %v351 = vunpack.c.l.b16 %v319
        %v352 = vunpack.c.l.b16 %v320
        %v353 = vunpack.c.l.b16 %v321
        %v354 = vunpack.c.l.b16 %v322
        %v355 = vunpack.c.l.b16 %v323
        %v356 = vunpack.c.l.b16 %v324
        %v357 = vunpack.c.l.b16 %v325
        %v358 = vunpack.c.l.b16 %v326
        %v359 = vunpack.c.l.b16 %v327
        %v360 = vunpack.c.l.b16 %v328
        %v361 = vunpack.c.l.b16 %v329
        %v362 = vunpack.c.l.b16 %v330
        %v363 = vunpack.c.l.b16 %v331
        %v364 = vunpack.c.l.b16 %v332
        %v365 = vunpack.c.l.b16 %v333
        %v366 = vpack.c.b16 %v351, %v350
        %v367 = vpack.c.b16 %v353, %v352
        %v368 = vpack.c.b16 %v355, %v354
        %v369 = vpack.c.b16 %v357, %v356
        %v370 = vpack.c.b16 %v359, %v358
        %v371 = vpack.c.b16 %v361, %v360
        %v372 = vpack.c.b16 %v363, %v362
        %v373 = vpack.c.b16 %v365, %v364
        %382 = vmatprep.subr.bf16.mxu0 0
        %383 = vmatpush1.bf16.msra.mxu0 %v366
        %384 = vmatprep.subr.bf16.mxu0 0
        %385 = vmatpush1.bf16.msra.mxu0 %v367
        %386 = vmatprep.subr.bf16.mxu0 0
        %387 = vmatpush1.bf16.msra.mxu0 %v368
        %388 = vmatprep.subr.bf16.mxu0 0
        %389 = vmatpush1.bf16.msra.mxu0 %v369
        %390 = vmatprep.subr.bf16.mxu0 0
        %391 = vmatpush1.bf16.msra.mxu0 %v370
        %392 = vmatprep.subr.bf16.mxu0 0
        %393 = vmatpush1.bf16.msra.mxu0 %v371
        %394 = vmatprep.subr.bf16.mxu0 0
        %395 = vmatpush1.bf16.msra.mxu0 %v372
        %396 = vmatprep.subr.bf16.mxu0 0
        %397 = vmatpush1.bf16.msra.mxu0 %v373
        %398 = vmatprep.subr.bf16.mxu0 0
        %399 = vmatpush1.bf16.msra.mxu0 0
        %400 = vmatprep.subr.bf16.mxu0 0
        %401 = vmatpush1.bf16.msra.mxu0 0
        %402 = vmatprep.subr.bf16.mxu0 0
        %403 = vmatpush1.bf16.msra.mxu0 0
        %404 = vmatprep.subr.bf16.mxu0 0
        %405 = vmatpush1.bf16.msra.mxu0 0
        %406 = vmatprep.subr.bf16.mxu0 0
        %407 = vmatpush1.bf16.msra.mxu0 0
        %408 = vmatprep.subr.bf16.mxu0 0
        %409 = vmatpush1.bf16.msra.mxu0 0
        %410 = vmatprep.subr.bf16.mxu0 0
        %411 = vmatpush1.bf16.msra.mxu0 0
        %412 = vmatprep.subr.bf16.mxu0 0
        %413 = vmatpush1.bf16.msra.mxu0 0
        %414 = vmatprep.mubr.bf16.mxu0 0
        %415 = vmatmul.mubr.bf16.gmra.mrb[0].mxu0 %v317
        %v416 = vpop.f32.mrb[0].mxu0
        %v417 = vadd.f32 0.0, %v416
        %v418 = vpop.f32.mrb[0].mxu0
        %v419 = vpop.f32.mrb[0].mxu0
        %v420 = vpop.f32.mrb[0].mxu0
        %421 = vdwg.mxu0
        %v422 = vmul.f32 %v417, 0.125
        %v423 = vld [vmem:[%s2] sm:$0x1]
        %v425 = vlaneseq
        %v426 = vshrl.u32 %v425, 7
        %v427 = vsub.s32 0, %v426
        %v428 = vrot.slane %v423, %v427
        %v430 = vadd.f32 %v422, %v428
        %v431 = vmax.f32 %v430, 0.0
        %v432 = vpack.c.bf16 %v431, %v431
        %v433 = vld [vmem:[#allocation5] sm:$0xf]
        %v434 = vld [vmem:[#allocation5 + $0x4] sm:$0xf]
        %v435 = vld [vmem:[#allocation5 + $0x8] sm:$0xf]
        %v436 = vld [vmem:[#allocation5 + $0xc] sm:$0xf]
        %v437 = vld [vmem:[#allocation5 + $0x10] sm:$0xf]
        %v438 = vld [vmem:[#allocation5 + $0x14] sm:$0xf]
        %v439 = vld [vmem:[#allocation5 + $0x18] sm:$0xf]
        %v440 = vld [vmem:[#allocation5 + $0x1c] sm:$0xf]
        %v441 = vld [vmem:[#allocation5 + $0x20] sm:$0xf]
        %v442 = vld [vmem:[#allocation5 + $0x24] sm:$0xf]
        %v443 = vld [vmem:[#allocation5 + $0x28] sm:$0xf]
        %v444 = vld [vmem:[#allocation5 + $0x2c] sm:$0xf]
        %v445 = vld [vmem:[#allocation5 + $0x30] sm:$0xf]
        %v446 = vld [vmem:[#allocation5 + $0x34] sm:$0xf]
        %v447 = vld [vmem:[#allocation5 + $0x38] sm:$0xf]
        %v448 = vld [vmem:[#allocation5 + $0x3c] sm:$0xf]
        %v449 = vld [vmem:[%s4] sm:$0x1]
        %v451 = vlaneseq
        %v452 = vshrl.u32 %v451, 7
        %v453 = vsub.s32 0, %v452
        %v454 = vrot.slane %v449, %v453
        %v472 = vunpack.c.l.b16 %v433
        %v473 = vunpack.c.l.b16 %v434
        %v474 = vunpack.c.l.b16 %v435
        %v475 = vunpack.c.l.b16 %v436
        %v476 = vunpack.c.l.b16 %v437
        %v477 = vunpack.c.l.b16 %v438
        %v478 = vunpack.c.l.b16 %v439
        %v479 = vunpack.c.l.b16 %v440
        %v480 = vunpack.c.l.b16 %v441
        %v481 = vunpack.c.l.b16 %v442
        %v482 = vunpack.c.l.b16 %v443
        %v483 = vunpack.c.l.b16 %v444
        %v484 = vunpack.c.l.b16 %v445
        %v485 = vunpack.c.l.b16 %v446
        %v486 = vunpack.c.l.b16 %v447
        %v487 = vunpack.c.l.b16 %v448
        %v488 = vpack.c.b16 %v473, %v472
        %v489 = vpack.c.b16 %v475, %v474
        %v490 = vpack.c.b16 %v477, %v476
        %v491 = vpack.c.b16 %v479, %v478
        %v492 = vpack.c.b16 %v481, %v480
        %v493 = vpack.c.b16 %v483, %v482
        %v494 = vpack.c.b16 %v485, %v484
        %v495 = vpack.c.b16 %v487, %v486
        %504 = vmatprep.subr.bf16.mxu0 0
        %505 = vmatpush1.bf16.msra.mxu0 %v488
        %506 = vmatprep.subr.bf16.mxu0 0
        %507 = vmatpush1.bf16.msra.mxu0 %v489
        %508 = vmatprep.subr.bf16.mxu0 0
        %509 = vmatpush1.bf16.msra.mxu0 %v490
        %510 = vmatprep.subr.bf16.mxu0 0
        %511 = vmatpush1.bf16.msra.mxu0 %v491
        %512 = vmatprep.subr.bf16.mxu0 0
        %513 = vmatpush1.bf16.msra.mxu0 %v492
        %514 = vmatprep.subr.bf16.mxu0 0
        %515 = vmatpush1.bf16.msra.mxu0 %v493
        %516 = vmatprep.subr.bf16.mxu0 0
        %517 = vmatpush1.bf16.msra.mxu0 %v494
        %518 = vmatprep.subr.bf16.mxu0 0
        %519 = vmatpush1.bf16.msra.mxu0 %v495
        %520 = vmatprep.subr.bf16.mxu0 0
        %521 = vmatpush1.bf16.msra.mxu0 0
        %522 = vmatprep.subr.bf16.mxu0 0
        %523 = vmatpush1.bf16.msra.mxu0 0
        %524 = vmatprep.subr.bf16.mxu0 0
        %525 = vmatpush1.bf16.msra.mxu0 0
        %526 = vmatprep.subr.bf16.mxu0 0
        %527 = vmatpush1.bf16.msra.mxu0 0
        %528 = vmatprep.subr.bf16.mxu0 0
        %529 = vmatpush1.bf16.msra.mxu0 0
        %530 = vmatprep.subr.bf16.mxu0 0
        %531 = vmatpush1.bf16.msra.mxu0 0
        %532 = vmatprep.subr.bf16.mxu0 0
        %533 = vmatpush1.bf16.msra.mxu0 0
        %534 = vmatprep.subr.bf16.mxu0 0
        %535 = vmatpush1.bf16.msra.mxu0 0
        %536 = vmatprep.mubr.bf16.mxu0 0
        %537 = vmatmul.mubr.bf16.gmra.mrb[0].mxu0 %v432
        %v538 = vpop.f32.mrb[0].mxu0
        %v539 = vadd.f32 %v454, %v538
        %v540 = vpop.f32.mrb[0].mxu0
        %v541 = vpop.f32.mrb[0].mxu0
        %v542 = vpop.f32.mrb[0].mxu0
        %543 = vdwg.mxu0
        %544 = vmax.xlane.f32.xlu0 %v539
        %v545 = vpop.xlane.xlu0 %544
        %v546 = vsub.f32 %v539, %v545
        %v547 = vmul.f32 %v546, 1.442695
        %v548 = vpow.pop %v547
        %549 = vadd.xlane.f32.xlu0 %v548
        %v550 = vpop.xlane.xlu0 %549
        %v551 = vlog2.pop %v550
        %v552 = vmul.f32 %v551, 0.6931472
        %v553 = vadd.f32 %v545, %v552
        %v554 = vsub.f32 %v539, %v553
        %555 = vst [vmem:[%s245] sm:$0xff] %v554
        %s556 = sand.u32 %s139, 1
        %s557 = scalar_lea.sflag [#allocation4], %s556
        %s558 = sand.u32 %s139, 1
        %s559 = smul.addr %s558, 8
        %s560 = scalar_lea.vmem [#allocation7], %s559
        // Predicated region
        $region49: #{tpu_custom_call.1} parent=39 // pred_check
          %p561 = pneg %p149
        $region50: #{tpu_custom_call.1} parent=39 // pred_check_branch
          %563 = sbr.rel (%p561) target = $region52
        $region51: #{tpu_custom_call.1} parent=39 // pred_region
          %s565 = ssub.s32 128, 128
          %566 = vsyncadd %s557, %s565
          %s567 = smul.addr %s21, 128
          %s568 = scalar_lea.hbm %s5, %s567
          %s570 = sshll.u32 %s560, 4
          %s571 = int_to_ptr.vmem [resolvable:$true] %s570
          %573 = dma.vmem_to_hbm [thread:$0]  %s571, 128, %s568, %s557
        $region52: #{tpu_custom_call.1} parent=39 // pred_fallthru
          _
      $region40: #{tpu_custom_call.1} parent=5 // pred_fallthru
        _
      %p574 = scmp.le.s32.totalorder 2, %s16
      // Predicated region
      $region53: #{tpu_custom_call.1} parent=5 // pred_check
        %p575 = pneg %p574
      $region54: #{tpu_custom_call.1} parent=5 // pred_check_branch
        %577 = sbr.rel (%p575) target = $region56
      $region55: #{tpu_custom_call.1} parent=5 // pred_region
        %s578 = ssub.s32 %s16, 2
        // Predicated region
        $region57: #{tpu_custom_call.1} parent=55 // pred_check
          %p579 = pneg %p155
        $region58: #{tpu_custom_call.1} parent=55 // pred_check_branch
          %581 = sbr.rel (%p579) target = $region60
        $region59: #{tpu_custom_call.1} parent=55 // pred_region
          %s582 = sand.u32 %s140, 1
          %s583 = scalar_lea.sflag [#allocation4], %s582
          %s584 = sand.u32 %s140, 1
          %s585 = smul.addr %s584, 8
          %s586 = scalar_lea.vmem [#allocation7], %s585
          %587 = dma.done %s583, 128
        $region60: #{tpu_custom_call.1} parent=55 // pred_fallthru
          _
      $region56: #{tpu_custom_call.1} parent=5 // pred_fallthru
        _
    $region6: #{tpu_custom_call.1} parent=1 // loop_footer
      %s20 = sadd.s32 1, %s16
    $region7: #{tpu_custom_call.1} parent=1 // loop_footer_branch
      %15 = sbr.rel target = $region3
    $region8: #{tpu_custom_call.1} parent=1 // loop_exit
      _
    %588 = vsyncpa [#allocation3], 1
    %s589 = scalar_lea.sflag [#allocation3], 1
    %590 = vsyncpa %s589, 1
    %591 = vsyncpa [#allocation6], 1
    %592 = vsyncpa [#allocation4], 1
    %s593 = scalar_lea.sflag [#allocation4], 1
    %594 = vsyncpa %s593, 1

</llo_original>
